<compile_context>
chip_gen: v5e
topology: v5e:2x2
jax: 0.10.0
libtpu: 0.0.40
codegen_flags: <defaults>
</compile_context>

<pallas_src>
import jax
import jax.numpy as jnp
from jax.experimental import pallas as pl
from jax.experimental.pallas import tpu as pltpu

_LANE = 128
_SUBLANE = 8


def _round_up(x, m):
    return ((x + m - 1) // m) * m


def _patch_embed_kernel(x_ref, w_ref, b_ref, o_ref):
    # x_ref: (TILE_M, K), w_ref: (K, N), b_ref: (1, N), o_ref: (TILE_M, N)
    acc = jnp.dot(x_ref[...], w_ref[...], preferred_element_type=jnp.float32)
    o_ref[...] = (acc + b_ref[...].astype(jnp.float32)).astype(o_ref.dtype)


def _patch_embed_matmul(x, w, b, *, tile_m=512, compute_dtype=jnp.bfloat16,
                        vmem_limit_bytes=32 * 1024 * 1024):
    """x: (M, K) f32, w: (K, N) f32, b: (1, N) f32 -> (M, N) f32 = x @ w + b."""
    M, K = x.shape
    _, N = w.shape

    # --- MXU / lane alignment: pad K and N up to multiples of 128 -------------
    K_pad = _round_up(K, _LANE)
    N_pad = _round_up(N, _LANE)
    if K_pad != K:
        x = jnp.pad(x, ((0, 0), (0, K_pad - K)))
        w = jnp.pad(w, ((0, K_pad - K), (0, 0)))
    if N_pad != N:
        w = jnp.pad(w, ((0, 0), (0, N_pad - N)))
        b = jnp.pad(b, ((0, 0), (0, N_pad - N)))

    # bf16 MXU inputs (cast in wrapper -> halves X/W DMA bytes); f32 accumulate.
    if compute_dtype is not None:
        x = x.astype(compute_dtype)
        w = w.astype(compute_dtype)

    # --- tile the M axis (rows are independent; W/bias stay VMEM-resident) ----
    tile_m = max(_SUBLANE, _round_up(min(tile_m, M), _SUBLANE))
    grid = (pl.cdiv(M, tile_m),)

    cost = pl.CostEstimate(
        flops=2 * M * K_pad * N_pad,
        transcendentals=0,
        bytes_accessed=(x.size * x.dtype.itemsize
                        + w.size * w.dtype.itemsize
                        + b.size * b.dtype.itemsize
                        + M * N_pad * 4),
    )

    out = pl.pallas_call(
        _patch_embed_kernel,
        out_shape=jax.ShapeDtypeStruct((M, N_pad), jnp.float32),
        grid=grid,
        in_specs=[
            pl.BlockSpec((tile_m, K_pad), lambda i: (i, 0)),   # streamed over M
            pl.BlockSpec((K_pad, N_pad), lambda i: (0, 0)),    # resident weight
            pl.BlockSpec((1, N_pad), lambda i: (0, 0)),        # resident bias
        ],
        out_specs=pl.BlockSpec((tile_m, N_pad), lambda i: (i, 0)),
        compiler_params=pltpu.CompilerParams(
            dimension_semantics=("parallel",),   # M tiles split across TCs on v7x
            vmem_limit_bytes=vmem_limit_bytes,
        ),
        cost_estimate=cost,
    )(x, w, b)

    if N_pad != N:
        out = out[:, :N]
    return out


def make_patch_embedding(images, weight, bias, patch_size, *, tile_m=512,
                         compute_dtype=jnp.bfloat16):
    """images: (B, C, H, W) f32 (NCHW, matching PyTorch)
       weight: (O, C, p, p) f32 (Conv2d / projection weight layout)
       bias:   (O,) f32
       returns (B, num_patches, O) f32
    """
    B, C, H, W = images.shape
    O = weight.shape[0]
    p = patch_size
    assert H % p == 0 and W % p == 0, "Image H/W not divisible by patch_size"
    hp, wp = H // p, W // p
    num_patches = hp * wp

    # TODO(synk): patch extraction still runs as one XLA transpose through HBM;
    # fusing it into the kernel (grid over (B, hp) + building the C*p*p row in
    # VMEM) would save an HBM round trip but risks Mosaic lowering of the 4-D
    # in-kernel permute, so it is left as plain-JAX glue here.
    x = images.reshape(B, C, hp, p, wp, p)
    x = jnp.transpose(x, (0, 2, 4, 1, 3, 5))          # (B, hp, wp, C, p, p)
    x = x.reshape(B * num_patches, C * p * p)         # (M, K)

    w = weight.reshape(O, C * p * p).T                # (K, N)
    b = bias.reshape(1, O)                            # (1, N)

    out = _patch_embed_matmul(x, w, b, tile_m=tile_m, compute_dtype=compute_dtype)
    return out.reshape(B, num_patches, O)


if __name__ == "__main__":
    # Small, deterministic example consistent with the module's forward.
    B, C, H, W = 2, 4, 16, 16
    patch_size = 8
    out_channel = 32

    key = jax.random.PRNGKey(0)
    k_img, k_w, k_b = jax.random.split(key, 3)

    images = jax.random.normal(k_img, (B, C, H, W), dtype=jnp.float32)
    weight = jax.random.normal(k_w, (out_channel, C, patch_size, patch_size),
                               dtype=jnp.float32) * 0.02
    bias = jax.random.normal(k_b, (out_channel,), dtype=jnp.float32) * 0.02

    # Pure-JAX reference (conv with stride=patch == linear patch projection).
    ref = jax.lax.conv_general_dilated(
        images, weight,
        window_strides=(patch_size, patch_size),
        padding="VALID",
        dimension_numbers=("NCHW", "OIHW", "NCHW"),
    ) + bias[None, :, None, None]
    ref = ref.reshape(B, out_channel, -1).transpose(0, 2, 1)

    num_patches = (H // patch_size) * (W // patch_size)

    # f32 MXU path (exact check).
    out_f32 = make_patch_embedding(images, weight, bias, patch_size,
                                   compute_dtype=None)
    out_f32 = jax.block_until_ready(out_f32)
    assert out_f32.shape == (B, num_patches, out_channel)
    assert jnp.allclose(out_f32, ref, atol=1e-4, rtol=1e-4)

    # bf16-input / f32-accumulate path (default, per perf review).
    out_bf16 = make_patch_embedding(images, weight, bias, patch_size)
    out_bf16 = jax.block_until_ready(out_bf16)
    assert out_bf16.shape == (B, num_patches, out_channel)
    assert jnp.allclose(out_bf16, ref, atol=3e-2, rtol=3e-2)

    print("KERNEL_OK")
</pallas_src>

<mosaic_0001>
module attributes {stable_mosaic.version = 11 : i64} {
  func.func @_patch_embed_kernel(%arg0: i32, %arg1: memref<8x256xf32, #tpu.memory_space<vmem>>, %arg2: memref<256x128xf32, #tpu.memory_space<vmem>>, %arg3: memref<1x128xf32, #tpu.memory_space<vmem>>, %arg4: memref<8x128xf32, #tpu.memory_space<vmem>>) attributes {dimension_semantics = [#tpu.dimension_semantics<parallel>], iteration_bounds = array<i64: 1>, scalar_prefetch = 0 : i64, scratch_operands = 0 : i64, tpu.core_type = #tpu.core_type<tc>, window_params = [{transform_indices = @transform_0, window_bounds = array<i64: 8, 256>}, {pipeline_mode = #tpu.pipeline_mode<synchronous>, transform_indices = @transform_1, window_bounds = array<i64: 256, 128>}, {pipeline_mode = #tpu.pipeline_mode<synchronous>, transform_indices = @transform_2, window_bounds = array<i64: 1, 128>}, {transform_indices = @transform_3, window_bounds = array<i64: 8, 128>}]} {
    %c0 = arith.constant 0 : index
    %c0_0 = arith.constant 0 : index
    %0 = vector.load %arg1[%c0, %c0_0] : memref<8x256xf32, #tpu.memory_space<vmem>>, vector<8x256xf32>
    %c0_1 = arith.constant 0 : index
    %c0_2 = arith.constant 0 : index
    %1 = vector.load %arg2[%c0_1, %c0_2] : memref<256x128xf32, #tpu.memory_space<vmem>>, vector<256x128xf32>
    %cst = arith.constant dense<0.000000e+00> : vector<8x128xf32>
    %2 = tpu.matmul %0, %1, %cst {dimension_numbers = #tpu.dot_dimension_numbers<[1], [0], [0], [1], [0, 0, 1, 1], [], []>} : vector<8x256xf32>, vector<256x128xf32>, vector<8x128xf32> -> vector<8x128xf32>
    %c0_3 = arith.constant 0 : index
    %c0_4 = arith.constant 0 : index
    %3 = vector.load %arg3[%c0_3, %c0_4] : memref<1x128xf32, #tpu.memory_space<vmem>>, vector<1x128xf32>
    %4 = vector.broadcast %3 : vector<1x128xf32> to vector<8x128xf32>
    %5 = arith.addf %2, %4 : vector<8x128xf32>
    %c0_5 = arith.constant 0 : index
    %c0_6 = arith.constant 0 : index
    %6 = vector.load %arg4[%c0_5, %c0_6] : memref<8x128xf32, #tpu.memory_space<vmem>>, vector<8x128xf32>
    tpu.vector_store %arg4[%c0_5, %c0_6], %5 {strides = array<i32>} : memref<8x128xf32, #tpu.memory_space<vmem>>, vector<8x128xf32>,
    return
  }
  func.func @transform_0(%arg0: i32) -> (i32, i32) {
    %c0_i32 = arith.constant 0 : i32
    %c0_i32_0 = arith.constant 0 : i32
    return %arg0, %c0_i32 : i32, i32
  }
  func.func @transform_1(%arg0: i32) -> (i32, i32) {
    %c0_i32 = arith.constant 0 : i32
    %c0_i32_0 = arith.constant 0 : i32
    %c0_i32_1 = arith.constant 0 : i32
    return %c0_i32, %c0_i32_0 : i32, i32
  }
  func.func @transform_2(%arg0: i32) -> (i32, i32) {
    %c0_i32 = arith.constant 0 : i32
    %c0_i32_0 = arith.constant 0 : i32
    %c0_i32_1 = arith.constant 0 : i32
    return %c0_i32, %c0_i32_0 : i32, i32
  }
  func.func @transform_3(%arg0: i32) -> (i32, i32) {
    %c0_i32 = arith.constant 0 : i32
    %c0_i32_0 = arith.constant 0 : i32
    return %arg0, %c0_i32 : i32, i32
  }
}

</mosaic_0001>

<llo_original>
// kernel: tpu_custom_call.1
$region0: #{tpu_custom_call.1}
  #allocation0 [shape = 'u32[]', space=smem, size = 0x4, offset = 0x4, fixed_abs, tag = 'smem constant byte address 0x4 - core index']
  #allocation1 [shape = 'u32[72,128]{1,0:T(1,128)}', space=vmem, size = 0x9000, scoped, tag = 'internal scratch']
  %s0 = inlined_call_operand.hbm [shape: f32[8,256], index: 0, kind: input, shape index: {}]
  %s1 = inlined_call_operand.hbm [shape: f32[256,128], index: 1, kind: input, shape index: {}]
  %s2 = inlined_call_operand.vmem [shape: f32[1,128], index: 2, kind: input, shape index: {}]
  %s3 = inlined_call_operand.hbm [shape: f32[8,128], index: 3, kind: output, shape index: {}]
  %s4 = sld [smem:[#allocation0]]
  $region30: #{tpu_custom_call.1} parent=0
    _
  %s6 = ssub.s32 1, %s4
  %s7 = scalar_select 0, %s6, %s4
  $region1: #{tpu_custom_call.1} parent=0
    #allocation2 [shape = 'u8[8192]{0}', space=vmem, size = 0x2000, scoped, tag = 'input window, operand 0, single buffered']
    #allocation3 [shape = 's32[1]{0}', space=sflag, size = 0x4, scoped, tag = 'scoped memory for tpu_custom_call.1']
    #allocation4 [shape = 's32[1]{0}', space=sflag, size = 0x4, scoped, tag = 'scoped memory for tpu_custom_call.1']
    #allocation5 [shape = 'u8[131072]{0}', space=vmem, size = 0x20000, scoped, tag = 'input window, operand 1, single buffered']
    #allocation6 [shape = 's32[1]{0}', space=sflag, size = 0x4, scoped, tag = 'scoped memory for tpu_custom_call.1']
    #allocation7 [shape = 'u8[4096]{0}', space=vmem, size = 0x1000, scoped, tag = 'output window, operand 0, single buffered']
    %8 = vsyncpa [#allocation3], 0
    %9 = vsyncpa [#allocation6], 0
    %10 = vsyncpa [#allocation4], 0
    // Predicated region
    $region2: #{tpu_custom_call.1} parent=1 // pred_check
      _
    $region3: #{tpu_custom_call.1} parent=1 // pred_check_branch
      %12 = sbr.rel (0) target = $region5
    $region4: #{tpu_custom_call.1} parent=1 // pred_region
      %14 = vsyncadd [#allocation3], 0
      %s16 = sshll.u32 %s0, 4
      %s17 = int_to_ptr.hbm [resolvable:$true] %s16
      %s18 = sshll.u32 [#allocation2], 4
      %s19 = int_to_ptr.vmem [resolvable:$true] %s18
      %21 = dma.hbm_to_vmem [thread:$0]  %s17, 256, %s19, [#allocation3]
    $region5: #{tpu_custom_call.1} parent=1 // pred_fallthru
      _
    // Predicated region
    $region6: #{tpu_custom_call.1} parent=1 // pred_check
      _
    $region7: #{tpu_custom_call.1} parent=1 // pred_check_branch
      %23 = sbr.rel (0) target = $region9
    $region8: #{tpu_custom_call.1} parent=1 // pred_region
      %25 = vsyncadd [#allocation6], 0
      %s26 = sshll.u32 %s1, 4
      %s27 = int_to_ptr.hbm [resolvable:$true] %s26
      %s28 = sshll.u32 [#allocation5], 4
      %s29 = int_to_ptr.vmem [resolvable:$true] %s28
      %34 = dma.hbm_to_vmem [thread:$0]  %s27, 4096, %s29, [#allocation6], 128, 128, 8
    $region9: #{tpu_custom_call.1} parent=1 // pred_fallthru
      _
    // Predicated region
    $region10: #{tpu_custom_call.1} parent=1 // pred_check
      _
    $region11: #{tpu_custom_call.1} parent=1 // pred_check_branch
      %36 = sbr.rel (0) target = $region13
    $region12: #{tpu_custom_call.1} parent=1 // pred_region
      _
    $region13: #{tpu_custom_call.1} parent=1 // pred_fallthru
      _
    // Predicated region
    $region14: #{tpu_custom_call.1} parent=1 // pred_check
      _
    $region15: #{tpu_custom_call.1} parent=1 // pred_check_branch
      %38 = sbr.rel (0) target = $region17
    $region16: #{tpu_custom_call.1} parent=1 // pred_region
      %40 = dma.done [#allocation3], 256
    $region17: #{tpu_custom_call.1} parent=1 // pred_fallthru
      _
    // Predicated region
    $region18: #{tpu_custom_call.1} parent=1 // pred_check
      _
    $region19: #{tpu_custom_call.1} parent=1 // pred_check_branch
      %42 = sbr.rel (0) target = $region21
    $region20: #{tpu_custom_call.1} parent=1 // pred_region
      %44 = dma.done [#allocation6], 4096
    $region21: #{tpu_custom_call.1} parent=1 // pred_fallthru
      _
    %v45 = vld [vmem:[#allocation2] sm:$0xff]
    %v46 = vld [vmem:[#allocation2 + $0x8] sm:$0xff]
    %v47 = vld [vmem:[#allocation5] sm:$0xff]
    %v48 = vld [vmem:[#allocation5 + $0x8] sm:$0xff]
    %v49 = vld [vmem:[#allocation5 + $0x10] sm:$0xff]
    %v50 = vld [vmem:[#allocation5 + $0x18] sm:$0xff]
    %v51 = vld [vmem:[#allocation5 + $0x20] sm:$0xff]
    %v52 = vld [vmem:[#allocation5 + $0x28] sm:$0xff]
    %v53 = vld [vmem:[#allocation5 + $0x30] sm:$0xff]
    %v54 = vld [vmem:[#allocation5 + $0x38] sm:$0xff]
    %v55 = vld [vmem:[#allocation5 + $0x40] sm:$0xff]
    %v56 = vld [vmem:[#allocation5 + $0x48] sm:$0xff]
    %v57 = vld [vmem:[#allocation5 + $0x50] sm:$0xff]
    %v58 = vld [vmem:[#allocation5 + $0x58] sm:$0xff]
    %v59 = vld [vmem:[#allocation5 + $0x60] sm:$0xff]
    %v60 = vld [vmem:[#allocation5 + $0x68] sm:$0xff]
    %v61 = vld [vmem:[#allocation5 + $0x70] sm:$0xff]
    %v62 = vld [vmem:[#allocation5 + $0x78] sm:$0xff]
    %v63 = vld [vmem:[#allocation5 + $0x80] sm:$0xff]
    %v64 = vld [vmem:[#allocation5 + $0x88] sm:$0xff]
    %v65 = vld [vmem:[#allocation5 + $0x90] sm:$0xff]
    %v66 = vld [vmem:[#allocation5 + $0x98] sm:$0xff]
    %v67 = vld [vmem:[#allocation5 + $0xa0] sm:$0xff]
    %v68 = vld [vmem:[#allocation5 + $0xa8] sm:$0xff]
    %v69 = vld [vmem:[#allocation5 + $0xb0] sm:$0xff]
    %v70 = vld [vmem:[#allocation5 + $0xb8] sm:$0xff]
    %v71 = vld [vmem:[#allocation5 + $0xc0] sm:$0xff]
    %v72 = vld [vmem:[#allocation5 + $0xc8] sm:$0xff]
    %v73 = vld [vmem:[#allocation5 + $0xd0] sm:$0xff]
    %v74 = vld [vmem:[#allocation5 + $0xd8] sm:$0xff]
    %v75 = vld [vmem:[#allocation5 + $0xe0] sm:$0xff]
    %v76 = vld [vmem:[#allocation5 + $0xe8] sm:$0xff]
    %v77 = vld [vmem:[#allocation5 + $0xf0] sm:$0xff]
    %v78 = vld [vmem:[#allocation5 + $0xf8] sm:$0xff]
    %v79 = vld [vmem:[%s2] sm:$0x1]
    %v81 = vperm.slane %v79, 0
    %83 = vmatpush.msra.mxu0 %v62
    %84 = vmatpush.msra.mxu0 %v61
    %85 = vmatpush.msra.mxu0 %v60
    %86 = vmatpush.msra.mxu0 %v59
    %87 = vmatpush.msra.mxu0 %v58
    %88 = vmatpush.msra.mxu0 %v57
    %89 = vmatpush.msra.mxu0 %v56
    %90 = vmatpush.msra.mxu0 %v55
    %91 = vmatpush.msra.mxu0 %v54
    %92 = vmatpush.msra.mxu0 %v53
    %93 = vmatpush.msra.mxu0 %v52
    %94 = vmatpush.msra.mxu0 %v51
    %95 = vmatpush.msra.mxu0 %v50
    %96 = vmatpush.msra.mxu0 %v49
    %97 = vmatpush.msra.mxu0 %v48
    %98 = vmatpush.msra.mxu0 %v47
    %99 = vmatmul.f32.gmra.mxu0 %v45
    %v100 = vpop.f32.mrf.mxu0
    %v101 = vadd.f32 %v81, %v100
    %102 = vdwg.mxu0
    %103 = vmatpush.msra.mxu0 %v78
    %104 = vmatpush.msra.mxu0 %v77
    %105 = vmatpush.msra.mxu0 %v76
    %106 = vmatpush.msra.mxu0 %v75
    %107 = vmatpush.msra.mxu0 %v74
    %108 = vmatpush.msra.mxu0 %v73
    %109 = vmatpush.msra.mxu0 %v72
    %110 = vmatpush.msra.mxu0 %v71
    %111 = vmatpush.msra.mxu0 %v70
    %112 = vmatpush.msra.mxu0 %v69
    %113 = vmatpush.msra.mxu0 %v68
    %114 = vmatpush.msra.mxu0 %v67
    %115 = vmatpush.msra.mxu0 %v66
    %116 = vmatpush.msra.mxu0 %v65
    %117 = vmatpush.msra.mxu0 %v64
    %118 = vmatpush.msra.mxu0 %v63
    %119 = vmatmul.f32.gmra.mxu0 %v46
    %v120 = vpop.f32.mrf.mxu0
    %v121 = vadd.f32 %v101, %v120
    %122 = vdwg.mxu0
    %123 = vst [vmem:[#allocation7] sm:$0xff] %v121
    // Predicated region
    $region22: #{tpu_custom_call.1} parent=1 // pred_check
      _
    $region23: #{tpu_custom_call.1} parent=1 // pred_check_branch
      %125 = sbr.rel (0) target = $region25
    $region24: #{tpu_custom_call.1} parent=1 // pred_region
      %127 = vsyncadd [#allocation4], 0
      %s129 = sshll.u32 [#allocation7], 4
      %s130 = int_to_ptr.vmem [resolvable:$true] %s129
      %s131 = sshll.u32 %s3, 4
      %s132 = int_to_ptr.hbm [resolvable:$true] %s131
      %134 = dma.vmem_to_hbm [thread:$0]  %s130, 128, %s132, [#allocation4]
    $region25: #{tpu_custom_call.1} parent=1 // pred_fallthru
      _
    // Predicated region
    $region26: #{tpu_custom_call.1} parent=1 // pred_check
      _
    $region27: #{tpu_custom_call.1} parent=1 // pred_check_branch
      %136 = sbr.rel (0) target = $region29
    $region28: #{tpu_custom_call.1} parent=1 // pred_region
      %138 = dma.done [#allocation4], 128
    $region29: #{tpu_custom_call.1} parent=1 // pred_fallthru
      _
    %139 = vsyncpa [#allocation3], 1
    %140 = vsyncpa [#allocation6], 1
    %141 = vsyncpa [#allocation4], 1

</llo_original>
